<compile_context>
chip_gen: v5e
topology: v5e:2x2
jax: 0.10.0
libtpu: 0.0.40
codegen_flags: <defaults>
</compile_context>

<pallas_src>
import random

import jax
import jax.numpy as jnp
from jax import lax
from jax.experimental import pallas as pl
from jax.experimental.pallas import tpu as pltpu


# ------------------------------- helpers -------------------------------------
def _resident_spec(shape):
    """Whole-array block with constant block index: DMA'd once, VMEM-resident."""
    zeros = (0,) * len(shape)
    return pl.BlockSpec(shape, lambda *args: zeros)


def _largest_divisor_leq(n, cap):
    for k in range(min(cap, n), 0, -1):
        if n % k == 0:
            return k
    return 1


def _lstm_gates(gates, c_prev):
    """PyTorch gate order [i, f, g, o]; all elementwise math in f32."""
    H = c_prev.shape[-1]
    i = jax.nn.sigmoid(gates[:, 0 * H:1 * H])
    f = jax.nn.sigmoid(gates[:, 1 * H:2 * H])
    g = jnp.tanh(gates[:, 2 * H:3 * H])
    o = jax.nn.sigmoid(gates[:, 3 * H:4 * H])
    c = f * c_prev + i * g
    h = o * jnp.tanh(c)
    return h, c


# ---------------- tiled linear (x @ W + b), parallel over (M, N) -------------
def _linear_kernel(x_ref, w_ref, b_ref, o_ref):
    o_ref[...] = (jnp.dot(x_ref[...], w_ref[...],
                          preferred_element_type=jnp.float32)
                  + b_ref[...]).astype(o_ref.dtype)


def linear(x, w, b, *, tm=256, tn=512, out_dtype=jnp.float32):
    M, K = x.shape
    N = w.shape[1]
    tm = min(tm, M)
    tn = min(tn, N)
    if M % tm:
        tm = M
    if N % tn:
        tn = N
    grid = (M // tm, N // tn)
    return pl.pallas_call(
        _linear_kernel,
        out_shape=jax.ShapeDtypeStruct((M, N), out_dtype),
        grid=grid,
        in_specs=[pl.BlockSpec((tm, K), lambda i, j: (i, 0)),
                  pl.BlockSpec((K, tn), lambda i, j: (0, j)),
                  pl.BlockSpec((1, tn), lambda i, j: (0, j))],
        out_specs=pl.BlockSpec((tm, tn), lambda i, j: (i, j)),
        compiler_params=pltpu.CompilerParams(
            dimension_semantics=("parallel", "parallel")),
    )(x, w, b)


# ------------------------------ encoder kernel -------------------------------
def _make_encoder_kernel(k_steps):
    def kernel(xp0_ref, whh0_ref, w1_ref, b1_ref,
               h0_out, c0_out, h1_out, c1_out,
               h0s, c0s, h1s, c1s):
        blk = pl.program_id(0)

        @pl.when(blk == 0)
        def _init():
            for r in (h0s, c0s, h1s, c1s):
                r[...] = jnp.zeros_like(r)

        def step(k, carry):
            # layer 0: x @ Wih0 + b0 was precomputed for the whole sequence;
            # only the recurrent h @ Whh0 term runs per step.
            g0 = xp0_ref[k] + jnp.dot(h0s[...].astype(jnp.bfloat16),
                                      whh0_ref[...],
                                      preferred_element_type=jnp.float32)
            h0, c0 = _lstm_gates(g0, c0s[...])
            h0s[...] = h0
            c0s[...] = c0

            # layer 1: single fused dot on [h0, h1_prev] @ [Wih1; Whh1]
            xh1 = jnp.concatenate([h0.astype(jnp.bfloat16),
                                   h1s[...].astype(jnp.bfloat16)], axis=1)
            g1 = (jnp.dot(xh1, w1_ref[...], preferred_element_type=jnp.float32)
                  + b1_ref[...])
            h1, c1 = _lstm_gates(g1, c1s[...])
            h1s[...] = h1
            c1s[...] = c1
            return carry

        lax.fori_loop(0, k_steps, step, 0, unroll=True)

        @pl.when(blk == pl.num_programs(0) - 1)
        def _final():
            h0_out[...] = h0s[...]
            c0_out[...] = c0s[...]
            h1_out[...] = h1s[...]
            c1_out[...] = c1s[...]
    return kernel


def encoder_forward(xp0, whh0, w1, b1, *, max_block=8):
    S, B, G = xp0.shape          # G = 4H
    H = G // 4
    KE = _largest_divisor_leq(S, max_block)   # K time steps per grid iteration
    state = jax.ShapeDtypeStruct((B, H), jnp.float32)
    return pl.pallas_call(
        _make_encoder_kernel(KE),
        out_shape=(state, state, state, state),
        grid_spec=pltpu.PrefetchScalarGridSpec(
            num_scalar_prefetch=0,
            grid=(S // KE,),
            in_specs=[
                pl.BlockSpec((KE, B, G), lambda t: (t, 0, 0)),  # K-step x-proj block
                _resident_spec(whh0.shape),
                _resident_spec(w1.shape),
                _resident_spec(b1.shape),
            ],
            out_specs=tuple(_resident_spec((B, H)) for _ in range(4)),
            scratch_shapes=[pltpu.VMEM((B, H), jnp.float32) for _ in range(4)],
        ),
        compiler_params=pltpu.CompilerParams(
            dimension_semantics=("arbitrary",)),   # true time recurrence
    )(xp0, whh0, w1, b1)


# ------------------------------ decoder kernel -------------------------------
def _make_decoder_kernel(k_steps):
    def kernel(tf_ref,
               x0_ref, embtrg_ref, h0i_ref, c0i_ref, h1i_ref, c1i_ref,
               w0_ref, b0_ref, w1_ref, b1_ref, fcw_ref, fcb_ref,
               emb_ref, laneids_ref,
               h1out_ref,
               x_scr, h0s, c0s, h1s, c1s):
        blk = pl.program_id(0)
        total = pl.num_programs(0) * k_steps

        @pl.when(blk == 0)
        def _init():
            x_scr[...] = x0_ref[...]
            h0s[...] = h0i_ref[...]
            c0s[...] = c0i_ref[...]
            h1s[...] = h1i_ref[...]
            c1s[...] = c1i_ref[...]

        def step(k, carry):
            x = x_scr[...]

            # decoder layer 0: fused [x, h0] @ [Wih0; Whh0]
            xh0 = jnp.concatenate([x, h0s[...].astype(jnp.bfloat16)], axis=1)
            g0 = (jnp.dot(xh0, w0_ref[...], preferred_element_type=jnp.float32)
                  + b0_ref[...])
            h0, c0 = _lstm_gates(g0, c0s[...])
            h0s[...] = h0
            c0s[...] = c0

            # decoder layer 1
            xh1 = jnp.concatenate([h0.astype(jnp.bfloat16),
                                   h1s[...].astype(jnp.bfloat16)], axis=1)
            g1 = (jnp.dot(xh1, w1_ref[...], preferred_element_type=jnp.float32)
                  + b1_ref[...])
            h1, c1 = _lstm_gates(g1, c1s[...])
            h1s[...] = h1
            c1s[...] = c1

            # emit h1 for this step; logits are computed later in one batched matmul.
            h1out_ref[k] = h1.astype(jnp.bfloat16)

            t_glob = blk * k_steps + k
            use_tf = tf_ref[t_glob] != 0
            need_greedy = jnp.logical_and(jnp.logical_not(use_tf),
                                          t_glob < total - 1)

            @pl.when(use_tf)
            def _teacher_forced():
                x_scr[...] = embtrg_ref[k]

            @pl.when(need_greedy)
            def _greedy():
                # Vocab projection + argmax + embedding gather only when the
                # prediction actually feeds the next step.
                logits = (jnp.dot(h1.astype(jnp.bfloat16), fcw_ref[...],
                                  preferred_element_type=jnp.float32)
                          + fcb_ref[...])
                pred_tok = jnp.argmax(logits, axis=1, keepdims=True)   # (B,1) i32
                onehot = (laneids_ref[...] == pred_tok).astype(jnp.bfloat16)
                x_scr[...] = jnp.dot(onehot, emb_ref[...],
                                     preferred_element_type=jnp.float32
                                     ).astype(jnp.bfloat16)

            return carry

        lax.fori_loop(0, k_steps, step, 0, unroll=True)
    return kernel


def decoder_forward(tf_mask, x0, emb_trg, h0, c0, h1, c1,
                    w0, b0, w1, b1, fcw, fcb, emb_bf16, lane_ids,
                    *, max_block=8):
    Tm1, B, E = emb_trg.shape
    H = h0.shape[1]
    KD = _largest_divisor_leq(Tm1, max_block)   # decode steps per grid iteration
    grid_spec = pltpu.PrefetchScalarGridSpec(
        num_scalar_prefetch=1,                       # tf_mask lives in SMEM
        grid=(Tm1 // KD,),
        in_specs=[
            _resident_spec(x0.shape),
            pl.BlockSpec((KD, B, E), lambda t, tf: (t, 0, 0)),  # teacher-forced emb
            _resident_spec(h0.shape),
            _resident_spec(c0.shape),
            _resident_spec(h1.shape),
            _resident_spec(c1.shape),
            _resident_spec(w0.shape),
            _resident_spec(b0.shape),
            _resident_spec(w1.shape),
            _resident_spec(b1.shape),
            _resident_spec(fcw.shape),
            _resident_spec(fcb.shape),
            _resident_spec(emb_bf16.shape),
            _resident_spec(lane_ids.shape),
        ],
        out_specs=pl.BlockSpec((KD, B, H), lambda t, tf: (t, 0, 0)),
        scratch_shapes=[
            pltpu.VMEM((B, E), jnp.bfloat16),   # carried input embedding
            pltpu.VMEM((B, H), jnp.float32),    # h0
            pltpu.VMEM((B, H), jnp.float32),    # c0
            pltpu.VMEM((B, H), jnp.float32),    # h1
            pltpu.VMEM((B, H), jnp.float32),    # c1
        ],
    )
    return pl.pallas_call(
        _make_decoder_kernel(KD),
        out_shape=jax.ShapeDtypeStruct((Tm1, B, H), jnp.bfloat16),
        grid_spec=grid_spec,
        compiler_params=pltpu.CompilerParams(
            dimension_semantics=("arbitrary",)),
    )(tf_mask, x0, emb_trg, h0, c0, h1, c1, w0, b0, w1, b1, fcw, fcb,
      emb_bf16, lane_ids)


# ------------------------------ parameter init -------------------------------
def init_params(key, vocab_size, embed_dim, hidden_dim, output_dim, padding_idx):
    # Feature dims kept multiples of 128 so 4H gate slices / vocab outputs are
    # lane-aligned full-vreg slabs (pad real-model dims up to 128/256 as needed).
    assert embed_dim % 128 == 0 and hidden_dim % 128 == 0
    assert vocab_size % 128 == 0 and output_dim % 128 == 0

    keys = iter(jax.random.split(key, 16))

    def w(shape):
        return jax.random.normal(next(keys), shape, jnp.float32) * 0.1

    H = hidden_dim
    # nn.Embedding(padding_idx=...) zeroes the padding row at init.
    emb = w((vocab_size, embed_dim)).at[padding_idx].set(0.0)

    def fused_lstm_layer(in_dim):
        # [Wih; Whh] stacked along K so the cell does one dot on [x, h].
        return dict(w=w((in_dim + H, 4 * H)).astype(jnp.bfloat16),
                    b=w((1, 4 * H)))                       # b_ih + b_hh combined

    # Encoder layer 0 keeps Wih separate: its input projection is batched over
    # the full source sequence before the recurrence.
    enc0 = dict(wih_t=w((embed_dim, 4 * H)).astype(jnp.bfloat16),
                whh_t=w((H, 4 * H)).astype(jnp.bfloat16),
                b=w((1, 4 * H)))

    return dict(
        emb=emb,
        enc0=enc0,
        enc1=fused_lstm_layer(H),
        dec0=fused_lstm_layer(embed_dim),
        dec1=fused_lstm_layer(H),
        fc_w_t=w((H, output_dim)).astype(jnp.bfloat16),
        fc_b=w((1, output_dim)),
    )


# --------------------------------- forward -----------------------------------
def nmt_forward(params, src, trg, p_tf=0.5, tf_seed=0):
    B_orig, src_len = src.shape
    _, trg_len = trg.shape
    H = params["enc0"]["whh_t"].shape[0]
    E = params["emb"].shape[1]
    V = params["fc_w_t"].shape[1]

    # pad batch to a multiple of 8 (sublanes) so vregs are fully populated
    B = max(8, -(-B_orig // 8) * 8)
    if B != B_orig:
        pad = B - B_orig
        src = jnp.concatenate([src, jnp.zeros((pad, src_len), src.dtype)], axis=0)
        trg = jnp.concatenate([trg, jnp.zeros((pad, trg_len), trg.dtype)], axis=0)

    emb_bf16 = params["emb"].astype(jnp.bfloat16)

    # TODO(synk): nn.Dropout(p=0.5) is treated as identity (eval mode); training-mode
    # dropout masks are not reproduced.

    # ------------------------------- encoder ----------------------------------
    src_emb = jnp.take(emb_bf16, src.T, axis=0)                 # (S, B, E) bf16
    xp0 = linear(src_emb.reshape(src_len * B, E),
                 params["enc0"]["wih_t"], params["enc0"]["b"])  # (S*B, 4H) f32
    xp0 = xp0.reshape(src_len, B, 4 * H)

    h0, c0, h1, c1 = encoder_forward(xp0, params["enc0"]["whh_t"],
                                     params["enc1"]["w"], params["enc1"]["b"])

    # ------------------------------- decoder ----------------------------------
    # Teacher-forcing coin flips: host RNG (as in the reference), baked into a
    # static mask so the compiled graph is fixed and the decode loop is fused.
    rng = random.Random(tf_seed)
    tf_mask = jnp.asarray([1 if rng.random() < p_tf else 0
                           for _ in range(trg_len - 1)], dtype=jnp.int32)

    x0 = jnp.take(emb_bf16, trg[:, 0], axis=0)                  # (B, E) bf16
    emb_trg = jnp.take(emb_bf16, trg[:, 1:].T, axis=0)          # (T-1, B, E) bf16
    lane_ids = jnp.arange(V, dtype=jnp.int32).reshape(1, V)     # hoisted iota

    h1_seq = decoder_forward(
        tf_mask, x0, emb_trg, h0, c0, h1, c1,
        params["dec0"]["w"], params["dec0"]["b"],
        params["dec1"]["w"], params["dec1"]["b"],
        params["fc_w_t"], params["fc_b"], emb_bf16, lane_ids)   # (T-1, B, H) bf16

    # Deferred vocab projection: one batched ((T-1)*B, H) @ (H, V) matmul,
    # tiled over (M, V) with parallel semantics — weights streamed once.
    logits = linear(h1_seq.reshape((trg_len - 1) * B, H),
                    params["fc_w_t"], params["fc_b"])           # ((T-1)*B, V) f32
    dec_logits = logits.reshape(trg_len - 1, B, V)

    outputs = jnp.concatenate(
        [jnp.zeros((B, 1, V), jnp.float32),
         jnp.transpose(dec_logits, (1, 0, 2))], axis=1)          # (B, T, V)
    return outputs[:B_orig]


if __name__ == "__main__":
    VOCAB = 256       # small lane-aligned stand-in for 50258
    EMBED = 128
    HIDDEN = 128
    B = 2
    SRC_LEN = 8
    TRG_LEN = 8
    PAD = VOCAB - 1   # stand-in for padding_idx=50257

    key = jax.random.PRNGKey(0)
    pkey, skey, tkey = jax.random.split(key, 3)

    params = init_params(pkey, VOCAB, EMBED, HIDDEN, VOCAB, PAD)
    src = jax.random.randint(skey, (B, SRC_LEN), 0, VOCAB - 1, dtype=jnp.int32)
    trg = jax.random.randint(tkey, (B, TRG_LEN), 0, VOCAB - 1, dtype=jnp.int32)

    out = nmt_forward(params, src, trg, p_tf=0.5, tf_seed=0)
    out = jax.block_until_ready(out)
    assert out.shape == (B, TRG_LEN, VOCAB)
    assert bool(jnp.all(out[:, 0, :] == 0.0))  # t=0 row stays zero, as in reference
    print("KERNEL_OK")
</pallas_src>

<mosaic_0001>
module attributes {stable_mosaic.version = 11 : i64} {
  func.func @_linear_kernel(%arg0: i32, %arg1: i32, %arg2: memref<64x128xbf16, #tpu.memory_space<vmem>>, %arg3: memref<128x512xbf16, #tpu.memory_space<vmem>>, %arg4: memref<1x512xf32, #tpu.memory_space<vmem>>, %arg5: memref<64x512xf32, #tpu.memory_space<vmem>>) attributes {dimension_semantics = [#tpu.dimension_semantics<parallel>, #tpu.dimension_semantics<parallel>], iteration_bounds = array<i64: 1, 1>, scalar_prefetch = 0 : i64, scratch_operands = 0 : i64, tpu.core_type = #tpu.core_type<tc>, window_params = [{transform_indices = @transform_0, window_bounds = array<i64: 64, 128>}, {transform_indices = @transform_1, window_bounds = array<i64: 128, 512>}, {transform_indices = @transform_2, window_bounds = array<i64: 1, 512>}, {transform_indices = @transform_3, window_bounds = array<i64: 64, 512>}]} {
    %c0 = arith.constant 0 : index
    %c0_0 = arith.constant 0 : index
    %0 = vector.load %arg2[%c0, %c0_0] : memref<64x128xbf16, #tpu.memory_space<vmem>>, vector<64x128xbf16>
    %c0_1 = arith.constant 0 : index
    %c0_2 = arith.constant 0 : index
    %1 = vector.load %arg3[%c0_1, %c0_2] : memref<128x512xbf16, #tpu.memory_space<vmem>>, vector<128x512xbf16>
    %cst = arith.constant dense<0.000000e+00> : vector<64x512xf32>
    %2 = tpu.matmul %0, %1, %cst {dimension_numbers = #tpu.dot_dimension_numbers<[1], [0], [0], [1], [0, 0, 1, 1], [], []>} : vector<64x128xbf16>, vector<128x512xbf16>, vector<64x512xf32> -> vector<64x512xf32>
    %c0_3 = arith.constant 0 : index
    %c0_4 = arith.constant 0 : index
    %3 = vector.load %arg4[%c0_3, %c0_4] : memref<1x512xf32, #tpu.memory_space<vmem>>, vector<1x512xf32>
    %4 = vector.broadcast %3 : vector<1x512xf32> to vector<64x512xf32>
    %5 = arith.addf %2, %4 : vector<64x512xf32>
    %c0_5 = arith.constant 0 : index
    %c0_6 = arith.constant 0 : index
    %6 = vector.load %arg5[%c0_5, %c0_6] : memref<64x512xf32, #tpu.memory_space<vmem>>, vector<64x512xf32>
    tpu.vector_store %arg5[%c0_5, %c0_6], %5 {strides = array<i32>} : memref<64x512xf32, #tpu.memory_space<vmem>>, vector<64x512xf32>,
    return
  }
  func.func @transform_0(%arg0: i32, %arg1: i32) -> (i32, i32) {
    %c0_i32 = arith.constant 0 : i32
    %c0_i32_0 = arith.constant 0 : i32
    return %arg0, %c0_i32 : i32, i32
  }
  func.func @transform_1(%arg0: i32, %arg1: i32) -> (i32, i32) {
    %c0_i32 = arith.constant 0 : i32
    %c0_i32_0 = arith.constant 0 : i32
    return %c0_i32, %arg1 : i32, i32
  }
  func.func @transform_2(%arg0: i32, %arg1: i32) -> (i32, i32) {
    %c0_i32 = arith.constant 0 : i32
    %c0_i32_0 = arith.constant 0 : i32
    return %c0_i32, %arg1 : i32, i32
  }
  func.func @transform_3(%arg0: i32, %arg1: i32) -> (i32, i32) {
    %c0_i32 = arith.constant 0 : i32
    return %arg0, %arg1 : i32, i32
  }
}

</mosaic_0001>

<llo_original>
// kernel: tpu_custom_call.1
$region0: #{tpu_custom_call.1}
  #allocation0 [shape = 'u32[]', space=smem, size = 0x4, offset = 0x4, fixed_abs, tag = 'smem constant byte address 0x4 - core index']
  #allocation1 [shape = 'u32[72,128]{1,0:T(1,128)}', space=vmem, size = 0x9000, scoped, tag = 'internal scratch']
  %s0 = inlined_call_operand.hbm [shape: bf16[64,128], index: 0, kind: input, shape index: {}]
  %s1 = inlined_call_operand.hbm [shape: bf16[128,512], index: 1, kind: input, shape index: {}]
  %s2 = inlined_call_operand.hbm [shape: f32[1,512], index: 2, kind: input, shape index: {}]
  %s3 = inlined_call_operand.hbm [shape: f32[64,512], index: 3, kind: output, shape index: {}]
  %s4 = sld [smem:[#allocation0]]
  $region34: #{tpu_custom_call.1} parent=0
    _
  %s6 = ssub.s32 1, %s4
  %s7 = scalar_select 0, %s6, %s4
  $region1: #{tpu_custom_call.1} parent=0
    #allocation2 [shape = 'u8[16384]{0}', space=vmem, size = 0x4000, scoped, tag = 'input window, operand 0, single buffered']
    #allocation3 [shape = 's32[1]{0}', space=sflag, size = 0x4, scoped, tag = 'scoped memory for tpu_custom_call.1']
    #allocation4 [shape = 's32[1]{0}', space=sflag, size = 0x4, scoped, tag = 'scoped memory for tpu_custom_call.1']
    #allocation5 [shape = 'u8[131072]{0}', space=vmem, size = 0x20000, scoped, tag = 'input window, operand 1, single buffered']
    #allocation6 [shape = 's32[1]{0}', space=sflag, size = 0x4, scoped, tag = 'scoped memory for tpu_custom_call.1']
    #allocation7 [shape = 'u8[2048]{0}', space=vmem, size = 0x800, scoped, tag = 'input window, operand 2, single buffered']
    #allocation8 [shape = 'u8[131072]{0}', space=vmem, size = 0x20000, scoped, tag = 'output window, operand 0, single buffered']
    %8 = vsyncpa [#allocation3], 0
    %9 = vsyncpa [#allocation6], 0
    %10 = vsyncpa [#allocation4], 0
    // Predicated region
    $region2: #{tpu_custom_call.1} parent=1 // pred_check
      _
    $region3: #{tpu_custom_call.1} parent=1 // pred_check_branch
      %12 = sbr.rel (0) target = $region5
    $region4: #{tpu_custom_call.1} parent=1 // pred_region
      %14 = vsyncadd [#allocation3], 0
      %s15 = sshll.u32 %s0, 4
      %s16 = int_to_ptr.hbm [resolvable:$true] %s15
      %s17 = sshll.u32 [#allocation2], 4
      %s18 = int_to_ptr.vmem [resolvable:$true] %s17
      %23 = dma.hbm_to_vmem [thread:$0]  %s16, 512, %s18, [#allocation3], 64, 64, 4
    $region5: #{tpu_custom_call.1} parent=1 // pred_fallthru
      _
    // Predicated region
    $region6: #{tpu_custom_call.1} parent=1 // pred_check
      _
    $region7: #{tpu_custom_call.1} parent=1 // pred_check_branch
      %25 = sbr.rel (0) target = $region9
    $region8: #{tpu_custom_call.1} parent=1 // pred_region
      %27 = vsyncadd [#allocation6], 0
      %s28 = sshll.u32 %s1, 4
      %s29 = int_to_ptr.hbm [resolvable:$true] %s28
      %s30 = sshll.u32 [#allocation5], 4
      %s31 = int_to_ptr.vmem [resolvable:$true] %s30
      %36 = dma.hbm_to_vmem [thread:$0]  %s29, 4096, %s31, [#allocation6], 256, 256, 16
    $region9: #{tpu_custom_call.1} parent=1 // pred_fallthru
      _
    // Predicated region
    $region10: #{tpu_custom_call.1} parent=1 // pred_check
      _
    $region11: #{tpu_custom_call.1} parent=1 // pred_check_branch
      %38 = sbr.rel (0) target = $region13
    $region12: #{tpu_custom_call.1} parent=1 // pred_region
      %40 = vsyncadd [#allocation6], 0
      %s42 = sshll.u32 %s2, 4
      %s43 = int_to_ptr.hbm [resolvable:$true] %s42
      %s44 = sshll.u32 [#allocation7], 4
      %s45 = int_to_ptr.vmem [resolvable:$true] %s44
      %47 = dma.hbm_to_vmem [thread:$0]  %s43, 64, %s45, [#allocation6]
    $region13: #{tpu_custom_call.1} parent=1 // pred_fallthru
      _
    // Predicated region
    $region14: #{tpu_custom_call.1} parent=1 // pred_check
      _
    $region15: #{tpu_custom_call.1} parent=1 // pred_check_branch
      %49 = sbr.rel (0) target = $region17
    $region16: #{tpu_custom_call.1} parent=1 // pred_region
      %51 = dma.done [#allocation3], 512
    $region17: #{tpu_custom_call.1} parent=1 // pred_fallthru
      _
    // Predicated region
    $region18: #{tpu_custom_call.1} parent=1 // pred_check
      _
    $region19: #{tpu_custom_call.1} parent=1 // pred_check_branch
      %53 = sbr.rel (0) target = $region21
    $region20: #{tpu_custom_call.1} parent=1 // pred_region
      %55 = dma.done [#allocation6], 4096
    $region21: #{tpu_custom_call.1} parent=1 // pred_fallthru
      _
    // Predicated region
    $region22: #{tpu_custom_call.1} parent=1 // pred_check
      _
    $region23: #{tpu_custom_call.1} parent=1 // pred_check_branch
      %57 = sbr.rel (0) target = $region25
    $region24: #{tpu_custom_call.1} parent=1 // pred_region
      %59 = dma.done [#allocation6], 64
    $region25: #{tpu_custom_call.1} parent=1 // pred_fallthru
      _
    %v60 = vld [vmem:[#allocation2] sm:$0xf]
    %v61 = vld [vmem:[#allocation2 + $0x4] sm:$0xf]
    %v62 = vld [vmem:[#allocation2 + $0x8] sm:$0xf]
    %v63 = vld [vmem:[#allocation2 + $0xc] sm:$0xf]
    %v64 = vld [vmem:[#allocation2 + $0x10] sm:$0xf]
    %v65 = vld [vmem:[#allocation2 + $0x14] sm:$0xf]
    %v66 = vld [vmem:[#allocation2 + $0x18] sm:$0xf]
    %v67 = vld [vmem:[#allocation2 + $0x1c] sm:$0xf]
    %v68 = vld [vmem:[#allocation5] sm:$0xff]
    %v69 = vld [vmem:[#allocation5 + $0x8] sm:$0xff]
    %v70 = vld [vmem:[#allocation5 + $0x10] sm:$0xff]
    %v71 = vld [vmem:[#allocation5 + $0x18] sm:$0xff]
    %v72 = vld [vmem:[#allocation5 + $0x20] sm:$0xff]
    %v73 = vld [vmem:[#allocation5 + $0x28] sm:$0xff]
    %v74 = vld [vmem:[#allocation5 + $0x30] sm:$0xff]
    %v75 = vld [vmem:[#allocation5 + $0x38] sm:$0xff]
    %v76 = vld [vmem:[#allocation5 + $0x40] sm:$0xff]
    %v77 = vld [vmem:[#allocation5 + $0x48] sm:$0xff]
    %v78 = vld [vmem:[#allocation5 + $0x50] sm:$0xff]
    %v79 = vld [vmem:[#allocation5 + $0x58] sm:$0xff]
    %v80 = vld [vmem:[#allocation5 + $0x60] sm:$0xff]
    %v81 = vld [vmem:[#allocation5 + $0x68] sm:$0xff]
    %v82 = vld [vmem:[#allocation5 + $0x70] sm:$0xff]
    %v83 = vld [vmem:[#allocation5 + $0x78] sm:$0xff]
    %v84 = vld [vmem:[#allocation5 + $0x80] sm:$0xff]
    %v85 = vld [vmem:[#allocation5 + $0x88] sm:$0xff]
    %v86 = vld [vmem:[#allocation5 + $0x90] sm:$0xff]
    %v87 = vld [vmem:[#allocation5 + $0x98] sm:$0xff]
    %v88 = vld [vmem:[#allocation5 + $0xa0] sm:$0xff]
    %v89 = vld [vmem:[#allocation5 + $0xa8] sm:$0xff]
    %v90 = vld [vmem:[#allocation5 + $0xb0] sm:$0xff]
    %v91 = vld [vmem:[#allocation5 + $0xb8] sm:$0xff]
    %v92 = vld [vmem:[#allocation5 + $0xc0] sm:$0xff]
    %v93 = vld [vmem:[#allocation5 + $0xc8] sm:$0xff]
    %v94 = vld [vmem:[#allocation5 + $0xd0] sm:$0xff]
    %v95 = vld [vmem:[#allocation5 + $0xd8] sm:$0xff]
    %v96 = vld [vmem:[#allocation5 + $0xe0] sm:$0xff]
    %v97 = vld [vmem:[#allocation5 + $0xe8] sm:$0xff]
    %v98 = vld [vmem:[#allocation5 + $0xf0] sm:$0xff]
    %v99 = vld [vmem:[#allocation5 + $0xf8] sm:$0xff]
    %v100 = vld [vmem:[#allocation7] sm:$0xf]
    %v102 = vperm.slane %v100, 0
    %v103 = vperm.slane %v100, 1
    %v104 = vperm.slane %v100, 2
    %v105 = vperm.slane %v100, 3
    %v118 = vunpack.c.l.b16 %v60
    %v119 = vunpack.c.l.b16 %v61
    %v120 = vunpack.c.l.b16 %v62
    %v121 = vunpack.c.l.b16 %v63
    %v122 = vunpack.c.l.b16 %v64
    %v123 = vunpack.c.l.b16 %v65
    %v124 = vunpack.c.l.b16 %v66
    %v125 = vunpack.c.l.b16 %v67
    %v126 = vpack.c.b16 %v119, %v118
    %v127 = vpack.c.b16 %v121, %v120
    %v128 = vpack.c.b16 %v123, %v122
    %v129 = vpack.c.b16 %v125, %v124
    %v166 = vunpack.c.l.b16 %v68
    %v167 = vunpack.c.h.b16 %v68
    %v168 = vunpack.c.l.b16 %v69
    %v169 = vunpack.c.h.b16 %v69
    %v170 = vunpack.c.l.b16 %v70
    %v171 = vunpack.c.h.b16 %v70
    %v172 = vunpack.c.l.b16 %v71
    %v173 = vunpack.c.h.b16 %v71
    %v174 = vunpack.c.l.b16 %v72
    %v175 = vunpack.c.h.b16 %v72
    %v176 = vunpack.c.l.b16 %v73
    %v177 = vunpack.c.h.b16 %v73
    %v178 = vunpack.c.l.b16 %v74
    %v179 = vunpack.c.h.b16 %v74
    %v180 = vunpack.c.l.b16 %v75
    %v181 = vunpack.c.h.b16 %v75
    %v182 = vunpack.c.l.b16 %v76
    %v183 = vunpack.c.h.b16 %v76
    %v184 = vunpack.c.l.b16 %v77
    %v185 = vunpack.c.h.b16 %v77
    %v186 = vunpack.c.l.b16 %v78
    %v187 = vunpack.c.h.b16 %v78
    %v188 = vunpack.c.l.b16 %v79
    %v189 = vunpack.c.h.b16 %v79
    %v190 = vunpack.c.l.b16 %v80
    %v191 = vunpack.c.h.b16 %v80
    %v192 = vunpack.c.l.b16 %v81
    %v193 = vunpack.c.h.b16 %v81
    %v194 = vunpack.c.l.b16 %v82
    %v195 = vunpack.c.h.b16 %v82
    %v196 = vunpack.c.l.b16 %v83
    %v197 = vunpack.c.h.b16 %v83
    %v198 = vunpack.c.l.b16 %v84
    %v199 = vunpack.c.h.b16 %v84
    %v200 = vunpack.c.l.b16 %v85
    %v201 = vunpack.c.h.b16 %v85
    %v202 = vunpack.c.l.b16 %v86
    %v203 = vunpack.c.h.b16 %v86
    %v204 = vunpack.c.l.b16 %v87
    %v205 = vunpack.c.h.b16 %v87
    %v206 = vunpack.c.l.b16 %v88
    %v207 = vunpack.c.h.b16 %v88
    %v208 = vunpack.c.l.b16 %v89
    %v209 = vunpack.c.h.b16 %v89
    %v210 = vunpack.c.l.b16 %v90
    %v211 = vunpack.c.h.b16 %v90
    %v212 = vunpack.c.l.b16 %v91
    %v213 = vunpack.c.h.b16 %v91
    %v214 = vunpack.c.l.b16 %v92
    %v215 = vunpack.c.h.b16 %v92
    %v216 = vunpack.c.l.b16 %v93
    %v217 = vunpack.c.h.b16 %v93
    %v218 = vunpack.c.l.b16 %v94
    %v219 = vunpack.c.h.b16 %v94
    %v220 = vunpack.c.l.b16 %v95
    %v221 = vunpack.c.h.b16 %v95
    %v222 = vunpack.c.l.b16 %v96
    %v223 = vunpack.c.h.b16 %v96
    %v224 = vunpack.c.l.b16 %v97
    %v225 = vunpack.c.h.b16 %v97
    %v226 = vunpack.c.l.b16 %v98
    %v227 = vunpack.c.h.b16 %v98
    %v228 = vunpack.c.l.b16 %v99
    %v229 = vunpack.c.h.b16 %v99
    %v230 = vpack.c.b16 %v170, %v166
    %v231 = vpack.c.b16 %v171, %v167
    %v232 = vpack.c.b16 %v172, %v168
    %v233 = vpack.c.b16 %v173, %v169
    %v234 = vpack.c.b16 %v178, %v174
    %v235 = vpack.c.b16 %v179, %v175
    %v236 = vpack.c.b16 %v180, %v176
    %v237 = vpack.c.b16 %v181, %v177
    %v238 = vpack.c.b16 %v186, %v182
    %v239 = vpack.c.b16 %v187, %v183
    %v240 = vpack.c.b16 %v188, %v184
    %v241 = vpack.c.b16 %v189, %v185
    %v242 = vpack.c.b16 %v194, %v190
    %v243 = vpack.c.b16 %v195, %v191
    %v244 = vpack.c.b16 %v196, %v192
    %v245 = vpack.c.b16 %v197, %v193
    %v246 = vpack.c.b16 %v202, %v198
    %v247 = vpack.c.b16 %v203, %v199
    %v248 = vpack.c.b16 %v204, %v200
    %v249 = vpack.c.b16 %v205, %v201
    %v250 = vpack.c.b16 %v210, %v206
    %v251 = vpack.c.b16 %v211, %v207
    %v252 = vpack.c.b16 %v212, %v208
    %v253 = vpack.c.b16 %v213, %v209
    %v254 = vpack.c.b16 %v218, %v214
    %v255 = vpack.c.b16 %v219, %v215
    %v256 = vpack.c.b16 %v220, %v216
    %v257 = vpack.c.b16 %v221, %v217
    %v258 = vpack.c.b16 %v226, %v222
    %v259 = vpack.c.b16 %v227, %v223
    %v260 = vpack.c.b16 %v228, %v224
    %v261 = vpack.c.b16 %v229, %v225
    %294 = vmatpush.bf16.msra.mxu0 %v258
    %295 = vmatpush.bf16.msra.mxu0 %v254
    %296 = vmatpush.bf16.msra.mxu0 %v250
    %297 = vmatpush.bf16.msra.mxu0 %v246
    %298 = vmatpush.bf16.msra.mxu0 %v242
    %299 = vmatpush.bf16.msra.mxu0 %v238
    %300 = vmatpush.bf16.msra.mxu0 %v234
    %301 = vmatpush.bf16.msra.mxu0 %v230
    %302 = vmatmul.bf16.gmra.mxu0 %v126
    %v303 = vpop.f32.mrf.mxu0
    %v304 = vadd.f32 %v102, %v303
    %v305 = vpop.f32.mrf.mxu0
    %v306 = vadd.f32 %v102, %v305
    %307 = vmatmul.bf16.gmra.mxu0 %v127
    %v308 = vpop.f32.mrf.mxu0
    %v309 = vadd.f32 %v102, %v308
    %v310 = vpop.f32.mrf.mxu0
    %v311 = vadd.f32 %v102, %v310
    %312 = vmatmul.bf16.gmra.mxu0 %v128
    %v313 = vpop.f32.mrf.mxu0
    %v314 = vadd.f32 %v102, %v313
    %v315 = vpop.f32.mrf.mxu0
    %v316 = vadd.f32 %v102, %v315
    %317 = vmatmul.bf16.gmra.mxu0 %v129
    %v318 = vpop.f32.mrf.mxu0
    %v319 = vadd.f32 %v102, %v318
    %v320 = vpop.f32.mrf.mxu0
    %v321 = vadd.f32 %v102, %v320
    %322 = vdwg.mxu0
    %323 = vmatpush.bf16.msra.mxu0 %v259
    %324 = vmatpush.bf16.msra.mxu0 %v255
    %325 = vmatpush.bf16.msra.mxu0 %v251
    %326 = vmatpush.bf16.msra.mxu0 %v247
    %327 = vmatpush.bf16.msra.mxu0 %v243
    %328 = vmatpush.bf16.msra.mxu0 %v239
    %329 = vmatpush.bf16.msra.mxu0 %v235
    %330 = vmatpush.bf16.msra.mxu0 %v231
    %331 = vmatmul.bf16.gmra.mxu0 %v126
    %v332 = vpop.f32.mrf.mxu0
    %v333 = vadd.f32 %v103, %v332
    %v334 = vpop.f32.mrf.mxu0
    %v335 = vadd.f32 %v103, %v334
    %336 = vmatmul.bf16.gmra.mxu0 %v127
    %v337 = vpop.f32.mrf.mxu0
    %v338 = vadd.f32 %v103, %v337
    %v339 = vpop.f32.mrf.mxu0
    %v340 = vadd.f32 %v103, %v339
    %341 = vmatmul.bf16.gmra.mxu0 %v128
    %v342 = vpop.f32.mrf.mxu0
    %v343 = vadd.f32 %v103, %v342
    %v344 = vpop.f32.mrf.mxu0
    %v345 = vadd.f32 %v103, %v344
    %346 = vmatmul.bf16.gmra.mxu0 %v129
    %v347 = vpop.f32.mrf.mxu0
    %v348 = vadd.f32 %v103, %v347
    %v349 = vpop.f32.mrf.mxu0
    %v350 = vadd.f32 %v103, %v349
    %351 = vdwg.mxu0
    %352 = vmatpush.bf16.msra.mxu0 %v260
    %353 = vmatpush.bf16.msra.mxu0 %v256
    %354 = vmatpush.bf16.msra.mxu0 %v252
    %355 = vmatpush.bf16.msra.mxu0 %v248
    %356 = vmatpush.bf16.msra.mxu0 %v244
    %357 = vmatpush.bf16.msra.mxu0 %v240
    %358 = vmatpush.bf16.msra.mxu0 %v236
    %359 = vmatpush.bf16.msra.mxu0 %v232
    %360 = vmatmul.bf16.gmra.mxu0 %v126
    %v361 = vpop.f32.mrf.mxu0
    %v362 = vadd.f32 %v104, %v361
    %v363 = vpop.f32.mrf.mxu0
    %v364 = vadd.f32 %v104, %v363
    %365 = vmatmul.bf16.gmra.mxu0 %v127
    %v366 = vpop.f32.mrf.mxu0
    %v367 = vadd.f32 %v104, %v366
    %v368 = vpop.f32.mrf.mxu0
    %v369 = vadd.f32 %v104, %v368
    %370 = vmatmul.bf16.gmra.mxu0 %v128
    %v371 = vpop.f32.mrf.mxu0
    %v372 = vadd.f32 %v104, %v371
    %v373 = vpop.f32.mrf.mxu0
    %v374 = vadd.f32 %v104, %v373
    %375 = vmatmul.bf16.gmra.mxu0 %v129
    %v376 = vpop.f32.mrf.mxu0
    %v377 = vadd.f32 %v104, %v376
    %v378 = vpop.f32.mrf.mxu0
    %v379 = vadd.f32 %v104, %v378
    %380 = vdwg.mxu0
    %381 = vmatpush.bf16.msra.mxu0 %v261
    %382 = vmatpush.bf16.msra.mxu0 %v257
    %383 = vmatpush.bf16.msra.mxu0 %v253
    %384 = vmatpush.bf16.msra.mxu0 %v249
    %385 = vmatpush.bf16.msra.mxu0 %v245
    %386 = vmatpush.bf16.msra.mxu0 %v241
    %387 = vmatpush.bf16.msra.mxu0 %v237
    %388 = vmatpush.bf16.msra.mxu0 %v233
    %389 = vmatmul.bf16.gmra.mxu0 %v126
    %v390 = vpop.f32.mrf.mxu0
    %v391 = vadd.f32 %v105, %v390
    %v392 = vpop.f32.mrf.mxu0
    %v393 = vadd.f32 %v105, %v392
    %394 = vmatmul.bf16.gmra.mxu0 %v127
    %v395 = vpop.f32.mrf.mxu0
    %v396 = vadd.f32 %v105, %v395
    %v397 = vpop.f32.mrf.mxu0
    %v398 = vadd.f32 %v105, %v397
    %399 = vmatmul.bf16.gmra.mxu0 %v128
    %v400 = vpop.f32.mrf.mxu0
    %v401 = vadd.f32 %v105, %v400
    %v402 = vpop.f32.mrf.mxu0
    %v403 = vadd.f32 %v105, %v402
    %404 = vmatmul.bf16.gmra.mxu0 %v129
    %v405 = vpop.f32.mrf.mxu0
    %v406 = vadd.f32 %v105, %v405
    %v407 = vpop.f32.mrf.mxu0
    %v408 = vadd.f32 %v105, %v407
    %409 = vdwg.mxu0
    %410 = vst [vmem:[#allocation8] sm:$0xff] %v304
    %411 = vst [vmem:[#allocation8 + $0x8] sm:$0xff] %v333
    %412 = vst [vmem:[#allocation8 + $0x10] sm:$0xff] %v362
    %413 = vst [vmem:[#allocation8 + $0x18] sm:$0xff] %v391
    %414 = vst [vmem:[#allocation8 + $0x20] sm:$0xff] %v306
    %415 = vst [vmem:[#allocation8 + $0x28] sm:$0xff] %v335
    %416 = vst [vmem:[#allocation8 + $0x30] sm:$0xff] %v364
    %417 = vst [vmem:[#allocation8 + $0x38] sm:$0xff] %v393
    %418 = vst [vmem:[#allocation8 + $0x40] sm:$0xff] %v309
    %419 = vst [vmem:[#allocation8 + $0x48] sm:$0xff] %v338
    %420 = vst [vmem:[#allocation8 + $0x50] sm:$0xff] %v367
    %421 = vst [vmem:[#allocation8 + $0x58] sm:$0xff] %v396
    %422 = vst [vmem:[#allocation8 + $0x60] sm:$0xff] %v311
    %423 = vst [vmem:[#allocation8 + $0x68] sm:$0xff] %v340
    %424 = vst [vmem:[#allocation8 + $0x70] sm:$0xff] %v369
    %425 = vst [vmem:[#allocation8 + $0x78] sm:$0xff] %v398
    %426 = vst [vmem:[#allocation8 + $0x80] sm:$0xff] %v314
    %427 = vst [vmem:[#allocation8 + $0x88] sm:$0xff] %v343
    %428 = vst [vmem:[#allocation8 + $0x90] sm:$0xff] %v372
    %429 = vst [vmem:[#allocation8 + $0x98] sm:$0xff] %v401
    %430 = vst [vmem:[#allocation8 + $0xa0] sm:$0xff] %v316
    %431 = vst [vmem:[#allocation8 + $0xa8] sm:$0xff] %v345
    %432 = vst [vmem:[#allocation8 + $0xb0] sm:$0xff] %v374
    %433 = vst [vmem:[#allocation8 + $0xb8] sm:$0xff] %v403
    %434 = vst [vmem:[#allocation8 + $0xc0] sm:$0xff] %v319
    %435 = vst [vmem:[#allocation8 + $0xc8] sm:$0xff] %v348
    %436 = vst [vmem:[#allocation8 + $0xd0] sm:$0xff] %v377
    %437 = vst [vmem:[#allocation8 + $0xd8] sm:$0xff] %v406
    %438 = vst [vmem:[#allocation8 + $0xe0] sm:$0xff] %v321
    %439 = vst [vmem:[#allocation8 + $0xe8] sm:$0xff] %v350
    %440 = vst [vmem:[#allocation8 + $0xf0] sm:$0xff] %v379
    %441 = vst [vmem:[#allocation8 + $0xf8] sm:$0xff] %v408
    // Predicated region
    $region26: #{tpu_custom_call.1} parent=1 // pred_check
      _
    $region27: #{tpu_custom_call.1} parent=1 // pred_check_branch
      %443 = sbr.rel (0) target = $region29
    $region28: #{tpu_custom_call.1} parent=1 // pred_region
      %445 = vsyncadd [#allocation4], 0
      %s446 = sshll.u32 [#allocation8], 4
      %s447 = int_to_ptr.vmem [resolvable:$true] %s446
      %s448 = sshll.u32 %s3, 4
      %s449 = int_to_ptr.hbm [resolvable:$true] %s448
      %454 = dma.vmem_to_hbm [thread:$0]  %s447, 4096, %s449, [#allocation4], 512, 512, 32
    $region29: #{tpu_custom_call.1} parent=1 // pred_fallthru
      _
    // Predicated region
    $region30: #{tpu_custom_call.1} parent=1 // pred_check
      _
    $region31: #{tpu_custom_call.1} parent=1 // pred_check_branch
      %456 = sbr.rel (0) target = $region33
    $region32: #{tpu_custom_call.1} parent=1 // pred_region
      %458 = dma.done [#allocation4], 4096
    $region33: #{tpu_custom_call.1} parent=1 // pred_fallthru
      _
    %459 = vsyncpa [#allocation3], 1
    %460 = vsyncpa [#allocation6], 1
    %461 = vsyncpa [#allocation4], 1

</llo_original>
